<compile_context>
chip_gen: v7x
topology: tpu7x:2x2x1
jax: 0.10.0
libtpu: 0.0.40
codegen_flags: <defaults>
</compile_context>

<pallas_src>
import math
import string

import jax
import jax.numpy as jnp
from jax.experimental import pallas as pl
from jax.experimental.pallas import tpu as pltpu


def rnn_seq_kernel(idx_ref,                                            # SMEM (T, B) int32 letter ids
                   h0_ref, wx_ref, wh_ref, bx_ref, blh_ref, wlo_ref, blo_ref,
                   out_ref, h_out_ref,
                   h_scr):
    b_blk = pl.program_id(0)
    t = pl.program_id(1)
    Bb, H = h_scr.shape

    # t == 0: seed the VMEM-carried hidden state for this batch block.
    @pl.when(t == 0)
    def _():
        h_scr[...] = h0_ref[...]

    h = h_scr[...]                                                     # (Bb, H) f32

    # --- x side: one-hot input  =>  row gather of the fused x-weight + fused bias ----------
    base = b_blk * Bb
    rows = [wx_ref[pl.ds(idx_ref[t, base + i], 1), :] for i in range(Bb)]   # Bb x (1, 3H) f32
    x_proj = jnp.concatenate(rows, axis=0) + bx_ref[...]               # (Bb, 3H) f32

    # --- h side: single fused MXU issue  (Bb, H) @ (H, 3H), bf16 in / f32 accumulate --------
    h_proj = jnp.dot(h.astype(wh_ref.dtype), wh_ref[...],
                     preferred_element_type=jnp.float32)               # (Bb, 3H) f32

    # gates (static, 128-aligned lane slices); elementwise math all f32
    r = jax.nn.sigmoid(x_proj[:, 0 * H:1 * H] + h_proj[:, 0 * H:1 * H])
    u = jax.nn.sigmoid(x_proj[:, 1 * H:2 * H] + h_proj[:, 1 * H:2 * H])
    n = jnp.tanh(x_proj[:, 2 * H:3 * H] + r * (h_proj[:, 2 * H:3 * H] + blh_ref[...]))
    h_new = (1.0 - u) * n + u * h
    h_scr[...] = h_new                                                 # carry in VMEM

    @pl.when(t == pl.num_programs(1) - 1)
    def _():
        h_out_ref[...] = h_new                                         # final hidden state

    # --- classifier + log-softmax, lane-dense 128-wide store --------------------------------
    logits = jnp.dot(h_new.astype(wlo_ref.dtype), wlo_ref[...],
                     preferred_element_type=jnp.float32) + blo_ref[...]    # (Bb, 128) f32
    m = jnp.max(logits, axis=1, keepdims=True)
    s = logits - m
    out_ref[0] = s - jnp.log(jnp.sum(jnp.exp(s), axis=1, keepdims=True))


def rnn_forward_seq(letter_ids, h0, p, *, n_output=None, batch_block=None):
    """Run the whole (T, B) character sequence in one gridded pallas_call.

    letter_ids: (T, B) int32 letter indices, h0: (B, H) f32.
    Returns (log_probs (T, B, n_output), h_final (B, H)).
    """
    T, B = letter_ids.shape
    H = h0.shape[1]
    I_pad, H3 = p["w_x"].shape
    O_pad = p["w_lo"].shape[1]
    if n_output is None:
        n_output = O_pad
    Bb = batch_block if batch_block is not None else min(B, 128)
    assert B % Bb == 0

    grid_spec = pltpu.PrefetchScalarGridSpec(
        num_scalar_prefetch=1,                                         # letter ids -> SMEM
        grid=(B // Bb, T),
        in_specs=[
            pl.BlockSpec((Bb, H), lambda b, t, idx: (b, 0)),           # h0
            pl.BlockSpec((I_pad, H3), lambda b, t, idx: (0, 0)),       # W_x  (resident, gathered)
            pl.BlockSpec((H, H3), lambda b, t, idx: (0, 0)),           # W_h  (resident, bf16)
            pl.BlockSpec((1, H3), lambda b, t, idx: (0, 0)),           # b_x  = [b_gr|b_gu|b_li]
            pl.BlockSpec((1, H), lambda b, t, idx: (0, 0)),            # b_lh
            pl.BlockSpec((H, O_pad), lambda b, t, idx: (0, 0)),        # W_lo (resident, bf16)
            pl.BlockSpec((1, O_pad), lambda b, t, idx: (0, 0)),        # b_lo (-1e30 padded)
        ],
        out_specs=[
            pl.BlockSpec((1, Bb, O_pad), lambda b, t, idx: (t, b, 0)),  # per-step log-probs
            pl.BlockSpec((Bb, H), lambda b, t, idx: (b, 0)),            # final hidden
        ],
        scratch_shapes=[pltpu.VMEM((Bb, H), jnp.float32)],              # carried hidden state
    )

    out, h_final = pl.pallas_call(
        rnn_seq_kernel,
        grid_spec=grid_spec,
        out_shape=(
            jax.ShapeDtypeStruct((T, B, O_pad), jnp.float32),
            jax.ShapeDtypeStruct((B, H), jnp.float32),
        ),
        compiler_params=pltpu.CompilerParams(
            # batch blocks are independent (v7x: shard across the 2 TCs);
            # time carries the hidden state -> sequential ("arbitrary").
            dimension_semantics=("parallel", "arbitrary"),
        ),
    )(letter_ids, h0, p["w_x"], p["w_h"], p["b_x"], p["b_lh"], p["w_lo"], p["b_lo"])

    return out[..., :n_output], h_final


def init_params(key, input_size, hidden_size, output_size):
    """PyTorch-style uniform(-1/sqrt(fan_in), 1/sqrt(fan_in)) init of the five Linears.
    Weights stored as (in_features, out_features); biases as (1, out_features)."""
    def linear(k, fan_in, fan_out):
        bound = 1.0 / math.sqrt(fan_in)
        kw, kb = jax.random.split(k)
        w = jax.random.uniform(kw, (fan_in, fan_out), jnp.float32, -bound, bound)
        b = jax.random.uniform(kb, (1, fan_out), jnp.float32, -bound, bound)
        return w, b

    k_gr, k_gu, k_li, k_lh, k_lo = jax.random.split(key, 5)
    w_gr, b_gr = linear(k_gr, input_size + hidden_size, hidden_size)
    w_gu, b_gu = linear(k_gu, input_size + hidden_size, hidden_size)
    w_li, b_li = linear(k_li, input_size, hidden_size)
    w_lh, b_lh = linear(k_lh, hidden_size, hidden_size)
    w_lo, b_lo = linear(k_lo, hidden_size, output_size)
    return dict(w_gr=w_gr, b_gr=b_gr, w_gu=w_gu, b_gu=b_gu, w_li=w_li, b_li=b_li,
                w_lh=w_lh, b_lh=b_lh, w_lo=w_lo, b_lo=b_lo)


def pack_params(p, input_size, hidden_size, output_size, *, lane_pad=128):
    """Fuse the five Linears into the kernel layout:
       W_x  = [Wgr_x | Wgu_x | Wli]  (I_pad, 3H) f32   (row-gathered, never matmul'd)
       W_h  = [Wgr_h | Wgu_h | Wlh]  (H, 3H)     bf16  (MXU operand)
       b_x  = [b_gr  | b_gu  | b_li] (1, 3H)     f32
       b_lh                          (1, H)      f32   (applied inside r * lh(h))
       W_lo zero-padded to 128 lanes (bf16); b_lo padded with -1e30 so padded logits
       vanish from the log-softmax normalizer."""
    I, H, O = input_size, hidden_size, output_size
    w_x = jnp.concatenate([p["w_gr"][:I], p["w_gu"][:I], p["w_li"]], axis=1)      # (I, 3H)
    i_pad = ((I + 7) // 8) * 8
    w_x = jnp.pad(w_x, ((0, i_pad - I), (0, 0)))                                   # (I_pad, 3H)
    w_h = jnp.concatenate([p["w_gr"][I:], p["w_gu"][I:], p["w_lh"]], axis=1)      # (H, 3H)
    b_x = jnp.concatenate([p["b_gr"], p["b_gu"], p["b_li"]], axis=1)              # (1, 3H)

    o_pad = max(lane_pad, ((O + lane_pad - 1) // lane_pad) * lane_pad)
    w_lo = jnp.pad(p["w_lo"], ((0, 0), (0, o_pad - O)))
    b_lo = jnp.pad(p["b_lo"], ((0, 0), (0, o_pad - O)), constant_values=-1e30)

    return {
        "w_x": w_x.astype(jnp.float32),
        "w_h": w_h.astype(jnp.bfloat16),
        "b_x": b_x.astype(jnp.float32),
        "b_lh": p["b_lh"].astype(jnp.float32),
        "w_lo": w_lo.astype(jnp.bfloat16),
        "b_lo": b_lo.astype(jnp.float32),
    }


def rnn_forward_ref(letter_ids, h0, packed, n_output):
    """Pure-JAX step-by-step reference mirroring the PyTorch forward, evaluated with the
    same (bf16-rounded) weights and matmul-operand rounding the kernel uses."""
    w_x = packed["w_x"]
    w_h = packed["w_h"].astype(jnp.float32)
    w_lo = packed["w_lo"].astype(jnp.float32)[:, :n_output]
    b_x, b_lh = packed["b_x"], packed["b_lh"]
    b_lo = packed["b_lo"][:, :n_output]
    H = h0.shape[1]
    hi = jax.lax.Precision.HIGHEST

    def step(h, ids_t):
        x_proj = w_x[ids_t] + b_x                                  # row gather == one-hot matmul
        hq = h.astype(jnp.bfloat16).astype(jnp.float32)            # match kernel MXU operand
        h_proj = jnp.dot(hq, w_h, precision=hi)
        r = jax.nn.sigmoid(x_proj[:, :H] + h_proj[:, :H])
        u = jax.nn.sigmoid(x_proj[:, H:2 * H] + h_proj[:, H:2 * H])
        n = jnp.tanh(x_proj[:, 2 * H:] + r * (h_proj[:, 2 * H:] + b_lh))
        h_new = (1.0 - u) * n + u * h
        hq2 = h_new.astype(jnp.bfloat16).astype(jnp.float32)
        logits = jnp.dot(hq2, w_lo, precision=hi) + b_lo
        return h_new, jax.nn.log_softmax(logits, axis=1)

    h_final, outs = jax.lax.scan(step, h0, letter_ids)
    return outs, h_final


if __name__ == "__main__":
    all_letters = string.ascii_letters + " .,;'"
    n_letters = len(all_letters)          # 57
    n_hidden = 128
    n_output = 18                         # e.g. number of name categories

    T, B = 8, 8                           # 8 names, space-padded to 8 chars (B >= 8 sublanes)

    def line_to_indices(line, length):
        line = (line + " " * length)[:length]
        return [all_letters.find(c) for c in line]

    names = ["Albert", "Satoshi", "Maria", "Chen",
             "Oliveira", "Dupont", "Kowalski", "Ahmed"]
    letter_ids = jnp.array([line_to_indices(nm, T) for nm in names], jnp.int32).T   # (T, B)

    key = jax.random.PRNGKey(0)
    raw = init_params(key, n_letters, n_hidden, n_output)
    params = pack_params(raw, n_letters, n_hidden, n_output)

    h0 = jnp.zeros((B, n_hidden), jnp.float32)

    out, h_final = rnn_forward_seq(letter_ids, h0, params, n_output=n_output)
    out = jax.block_until_ready(out)
    h_final = jax.block_until_ready(h_final)

    out_ref, h_ref = rnn_forward_ref(letter_ids, h0, params, n_output)
    assert out.shape == (T, B, n_output) and h_final.shape == (B, n_hidden)
    assert jnp.allclose(out, out_ref, atol=1e-2), \
        f"log-softmax mismatch: {jnp.max(jnp.abs(out - out_ref))}"
    assert jnp.allclose(h_final, h_ref, atol=1e-2), \
        f"hidden-state mismatch: {jnp.max(jnp.abs(h_final - h_ref))}"

    print("KERNEL_OK")
</pallas_src>

<mosaic_0001>
module attributes {stable_mosaic.version = 11 : i64} {
  func.func @rnn_seq_kernel(%arg0: i32, %arg1: i32, %arg2: memref<8x8xi32, #tpu.memory_space<smem>>, %arg3: memref<8x128xf32, #tpu.memory_space<vmem>>, %arg4: memref<64x384xf32, #tpu.memory_space<vmem>>, %arg5: memref<128x384xbf16, #tpu.memory_space<vmem>>, %arg6: memref<1x384xf32, #tpu.memory_space<vmem>>, %arg7: memref<1x128xf32, #tpu.memory_space<vmem>>, %arg8: memref<128x128xbf16, #tpu.memory_space<vmem>>, %arg9: memref<1x128xf32, #tpu.memory_space<vmem>>, %arg10: memref<1x8x128xf32, #tpu.memory_space<vmem>>, %arg11: memref<8x128xf32, #tpu.memory_space<vmem>>, %arg12: memref<8x128xf32, #tpu.memory_space<vmem>>) attributes {dimension_semantics = [#tpu.dimension_semantics<parallel>, #tpu.dimension_semantics<arbitrary>], iteration_bounds = array<i64: 1, 8>, scalar_prefetch = 1 : i64, scratch_operands = 1 : i64, tpu.core_type = #tpu.core_type<tc>, window_params = [{transform_indices = @transform_0, window_bounds = array<i64: 8, 128>}, {pipeline_mode = #tpu.pipeline_mode<synchronous>, transform_indices = @transform_1, window_bounds = array<i64: 64, 384>}, {pipeline_mode = #tpu.pipeline_mode<synchronous>, transform_indices = @transform_2, window_bounds = array<i64: 128, 384>}, {pipeline_mode = #tpu.pipeline_mode<synchronous>, transform_indices = @transform_3, window_bounds = array<i64: 1, 384>}, {pipeline_mode = #tpu.pipeline_mode<synchronous>, transform_indices = @transform_4, window_bounds = array<i64: 1, 128>}, {pipeline_mode = #tpu.pipeline_mode<synchronous>, transform_indices = @transform_5, window_bounds = array<i64: 128, 128>}, {pipeline_mode = #tpu.pipeline_mode<synchronous>, transform_indices = @transform_6, window_bounds = array<i64: 1, 128>}, {transform_indices = @transform_7, window_bounds = array<i64: 1, 8, 128>}, {transform_indices = @transform_8, window_bounds = array<i64: 8, 128>}]} {
    %c0_i32 = arith.constant 0 : i32
    %0 = arith.cmpi eq, %arg1, %c0_i32 : i32
    %1 = arith.extui %0 : i1 to i32
    %c0_i32_0 = arith.constant 0 : i32
    %2 = arith.cmpi ne, %1, %c0_i32_0 : i32
    scf.if %2 {
      %c0_34 = arith.constant 0 : index
      %c0_35 = arith.constant 0 : index
      %112 = vector.load %arg3[%c0_34, %c0_35] : memref<8x128xf32, #tpu.memory_space<vmem>>, vector<8x128xf32>
      %c0_36 = arith.constant 0 : index
      %c0_37 = arith.constant 0 : index
      %113 = vector.load %arg12[%c0_36, %c0_37] : memref<8x128xf32, #tpu.memory_space<vmem>>, vector<8x128xf32>
      tpu.vector_store %arg12[%c0_36, %c0_37], %112 {strides = array<i32>} : memref<8x128xf32, #tpu.memory_space<vmem>>, vector<8x128xf32>,
    } else {
    }
    %c0 = arith.constant 0 : index
    %c0_1 = arith.constant 0 : index
    %3 = vector.load %arg12[%c0, %c0_1] : memref<8x128xf32, #tpu.memory_space<vmem>>, vector<8x128xf32>
    %c8_i32 = arith.constant 8 : i32
    %4 = arith.muli %arg0, %c8_i32 : i32
    %c0_i32_2 = arith.constant 0 : i32
    %5 = arith.addi %4, %c0_i32_2 : i32
    %6 = arith.index_cast %arg1 : i32 to index
    %7 = arith.index_cast %5 : i32 to index
    %8 = memref.load %arg2[%6, %7] : memref<8x8xi32, #tpu.memory_space<smem>>
    %9 = arith.index_cast %8 : i32 to index
    %c0_3 = arith.constant 0 : index
    %10 = vector.load %arg4[%9, %c0_3] : memref<64x384xf32, #tpu.memory_space<vmem>>, vector<1x384xf32>
    %c1_i32 = arith.constant 1 : i32
    %11 = arith.addi %4, %c1_i32 : i32
    %12 = arith.index_cast %arg1 : i32 to index
    %13 = arith.index_cast %11 : i32 to index
    %14 = memref.load %arg2[%12, %13] : memref<8x8xi32, #tpu.memory_space<smem>>
    %15 = arith.index_cast %14 : i32 to index
    %c0_4 = arith.constant 0 : index
    %16 = vector.load %arg4[%15, %c0_4] : memref<64x384xf32, #tpu.memory_space<vmem>>, vector<1x384xf32>
    %c2_i32 = arith.constant 2 : i32
    %17 = arith.addi %4, %c2_i32 : i32
    %18 = arith.index_cast %arg1 : i32 to index
    %19 = arith.index_cast %17 : i32 to index
    %20 = memref.load %arg2[%18, %19] : memref<8x8xi32, #tpu.memory_space<smem>>
    %21 = arith.index_cast %20 : i32 to index
    %c0_5 = arith.constant 0 : index
    %22 = vector.load %arg4[%21, %c0_5] : memref<64x384xf32, #tpu.memory_space<vmem>>, vector<1x384xf32>
    %c3_i32 = arith.constant 3 : i32
    %23 = arith.addi %4, %c3_i32 : i32
    %24 = arith.index_cast %arg1 : i32 to index
    %25 = arith.index_cast %23 : i32 to index
    %26 = memref.load %arg2[%24, %25] : memref<8x8xi32, #tpu.memory_space<smem>>
    %27 = arith.index_cast %26 : i32 to index
    %c0_6 = arith.constant 0 : index
    %28 = vector.load %arg4[%27, %c0_6] : memref<64x384xf32, #tpu.memory_space<vmem>>, vector<1x384xf32>
    %c4_i32 = arith.constant 4 : i32
    %29 = arith.addi %4, %c4_i32 : i32
    %30 = arith.index_cast %arg1 : i32 to index
    %31 = arith.index_cast %29 : i32 to index
    %32 = memref.load %arg2[%30, %31] : memref<8x8xi32, #tpu.memory_space<smem>>
    %33 = arith.index_cast %32 : i32 to index
    %c0_7 = arith.constant 0 : index
    %34 = vector.load %arg4[%33, %c0_7] : memref<64x384xf32, #tpu.memory_space<vmem>>, vector<1x384xf32>
    %c5_i32 = arith.constant 5 : i32
    %35 = arith.addi %4, %c5_i32 : i32
    %36 = arith.index_cast %arg1 : i32 to index
    %37 = arith.index_cast %35 : i32 to index
    %38 = memref.load %arg2[%36, %37] : memref<8x8xi32, #tpu.memory_space<smem>>
    %39 = arith.index_cast %38 : i32 to index
    %c0_8 = arith.constant 0 : index
    %40 = vector.load %arg4[%39, %c0_8] : memref<64x384xf32, #tpu.memory_space<vmem>>, vector<1x384xf32>
    %c6_i32 = arith.constant 6 : i32
    %41 = arith.addi %4, %c6_i32 : i32
    %42 = arith.index_cast %arg1 : i32 to index
    %43 = arith.index_cast %41 : i32 to index
    %44 = memref.load %arg2[%42, %43] : memref<8x8xi32, #tpu.memory_space<smem>>
    %45 = arith.index_cast %44 : i32 to index
    %c0_9 = arith.constant 0 : index
    %46 = vector.load %arg4[%45, %c0_9] : memref<64x384xf32, #tpu.memory_space<vmem>>, vector<1x384xf32>
    %c7_i32 = arith.constant 7 : i32
    %47 = arith.addi %4, %c7_i32 : i32
    %48 = arith.index_cast %arg1 : i32 to index
    %49 = arith.index_cast %47 : i32 to index
    %50 = memref.load %arg2[%48, %49] : memref<8x8xi32, #tpu.memory_space<smem>>
    %51 = arith.index_cast %50 : i32 to index
    %c0_10 = arith.constant 0 : index
    %52 = vector.load %arg4[%51, %c0_10] : memref<64x384xf32, #tpu.memory_space<vmem>>, vector<1x384xf32>
    %53 = tpu.concatenate %10, %16, %22, %28, %34, %40, %46, %52 in 0 : vector<1x384xf32>, vector<1x384xf32>, vector<1x384xf32>, vector<1x384xf32>, vector<1x384xf32>, vector<1x384xf32>, vector<1x384xf32>, vector<1x384xf32> -> vector<8x384xf32>
    %c0_11 = arith.constant 0 : index
    %c0_12 = arith.constant 0 : index
    %54 = vector.load %arg6[%c0_11, %c0_12] : memref<1x384xf32, #tpu.memory_space<vmem>>, vector<1x384xf32>
    %55 = vector.broadcast %54 : vector<1x384xf32> to vector<8x384xf32>
    %56 = arith.addf %53, %55 : vector<8x384xf32>
    %57 = arith.truncf %3 : vector<8x128xf32> to vector<8x128xbf16>
    %c0_13 = arith.constant 0 : index
    %c0_14 = arith.constant 0 : index
    %58 = vector.load %arg5[%c0_13, %c0_14] : memref<128x384xbf16, #tpu.memory_space<vmem>>, vector<128x384xbf16>
    %cst = arith.constant dense<0.000000e+00> : vector<8x384xf32>
    %59 = tpu.matmul %57, %58, %cst {dimension_numbers = #tpu.dot_dimension_numbers<[1], [0], [0], [1], [0, 0, 1, 1], [], []>} : vector<8x128xbf16>, vector<128x384xbf16>, vector<8x384xf32> -> vector<8x384xf32>
    %60 = vector.extract_strided_slice %56 {offsets = [0, 0], sizes = [8, 128], strides = [1, 1]} : vector<8x384xf32> to vector<8x128xf32>
    %61 = vector.extract_strided_slice %59 {offsets = [0, 0], sizes = [8, 128], strides = [1, 1]} : vector<8x384xf32> to vector<8x128xf32>
    %62 = arith.addf %60, %61 : vector<8x128xf32>
    %63 = arith.negf %62 : vector<8x128xf32>
    %64 = math.exp %63 : vector<8x128xf32>
    %cst_15 = arith.constant 1.000000e+00 : f32
    %65 = vector.broadcast %cst_15 : f32 to vector<8x128xf32>
    %66 = arith.addf %65, %64 : vector<8x128xf32>
    %67 = arith.divf %65, %66 : vector<8x128xf32>
    %68 = vector.extract_strided_slice %56 {offsets = [0, 128], sizes = [8, 128], strides = [1, 1]} : vector<8x384xf32> to vector<8x128xf32>
    %69 = vector.extract_strided_slice %59 {offsets = [0, 128], sizes = [8, 128], strides = [1, 1]} : vector<8x384xf32> to vector<8x128xf32>
    %70 = arith.addf %68, %69 : vector<8x128xf32>
    %71 = arith.negf %70 : vector<8x128xf32>
    %72 = math.exp %71 : vector<8x128xf32>
    %cst_16 = arith.constant 1.000000e+00 : f32
    %73 = vector.broadcast %cst_16 : f32 to vector<8x128xf32>
    %74 = arith.addf %73, %72 : vector<8x128xf32>
    %75 = arith.divf %73, %74 : vector<8x128xf32>
    %76 = vector.extract_strided_slice %56 {offsets = [0, 256], sizes = [8, 128], strides = [1, 1]} : vector<8x384xf32> to vector<8x128xf32>
    %77 = vector.extract_strided_slice %59 {offsets = [0, 256], sizes = [8, 128], strides = [1, 1]} : vector<8x384xf32> to vector<8x128xf32>
    %c0_17 = arith.constant 0 : index
    %c0_18 = arith.constant 0 : index
    %78 = vector.load %arg7[%c0_17, %c0_18] : memref<1x128xf32, #tpu.memory_space<vmem>>, vector<1x128xf32>
    %79 = vector.broadcast %78 : vector<1x128xf32> to vector<8x128xf32>
    %80 = arith.addf %77, %79 : vector<8x128xf32>
    %81 = arith.mulf %67, %80 : vector<8x128xf32>
    %82 = arith.addf %76, %81 : vector<8x128xf32>
    %83 = math.tanh %82 : vector<8x128xf32>
    %cst_19 = arith.constant 1.000000e+00 : f32
    %84 = vector.broadcast %cst_19 : f32 to vector<8x128xf32>
    %85 = arith.subf %84, %75 : vector<8x128xf32>
    %86 = arith.mulf %85, %83 : vector<8x128xf32>
    %87 = arith.mulf %75, %3 : vector<8x128xf32>
    %88 = arith.addf %86, %87 : vector<8x128xf32>
    %c0_20 = arith.constant 0 : index
    %c0_21 = arith.constant 0 : index
    %89 = vector.load %arg12[%c0_20, %c0_21] : memref<8x128xf32, #tpu.memory_space<vmem>>, vector<8x128xf32>
    tpu.vector_store %arg12[%c0_20, %c0_21], %88 {strides = array<i32>} : memref<8x128xf32, #tpu.memory_space<vmem>>, vector<8x128xf32>,
    %c7_i32_22 = arith.constant 7 : i32
    %90 = arith.cmpi eq, %arg1, %c7_i32_22 : i32
    %91 = arith.extui %90 : i1 to i32
    %c0_i32_23 = arith.constant 0 : i32
    %92 = arith.cmpi ne, %91, %c0_i32_23 : i32
    scf.if %92 {
      %c0_34 = arith.constant 0 : index
      %c0_35 = arith.constant 0 : index
      %112 = vector.load %arg11[%c0_34, %c0_35] : memref<8x128xf32, #tpu.memory_space<vmem>>, vector<8x128xf32>
      tpu.vector_store %arg11[%c0_34, %c0_35], %88 {strides = array<i32>} : memref<8x128xf32, #tpu.memory_space<vmem>>, vector<8x128xf32>,
    } else {
    }
    %93 = arith.truncf %88 : vector<8x128xf32> to vector<8x128xbf16>
    %c0_24 = arith.constant 0 : index
    %c0_25 = arith.constant 0 : index
    %94 = vector.load %arg8[%c0_24, %c0_25] : memref<128x128xbf16, #tpu.memory_space<vmem>>, vector<128x128xbf16>
    %cst_26 = arith.constant dense<0.000000e+00> : vector<8x128xf32>
    %95 = tpu.matmul %93, %94, %cst_26 {dimension_numbers = #tpu.dot_dimension_numbers<[1], [0], [0], [1], [0, 0, 1, 1], [], []>} : vector<8x128xbf16>, vector<128x128xbf16>, vector<8x128xf32> -> vector<8x128xf32>
    %c0_27 = arith.constant 0 : index
    %c0_28 = arith.constant 0 : index
    %96 = vector.load %arg9[%c0_27, %c0_28] : memref<1x128xf32, #tpu.memory_space<vmem>>, vector<1x128xf32>
    %97 = vector.broadcast %96 : vector<1x128xf32> to vector<8x128xf32>
    %98 = arith.addf %95, %97 : vector<8x128xf32>
    %cst_29 = arith.constant dense<0xFF800000> : vector<8xf32>
    %99 = vector.multi_reduction <maximumf>, %98, %cst_29 [1] : vector<8x128xf32> to vector<8xf32>
    %100 = vector.shape_cast %99 : vector<8xf32> to vector<8x1xf32>
    %101 = vector.broadcast %100 : vector<8x1xf32> to vector<8x128xf32>
    %102 = arith.subf %98, %101 : vector<8x128xf32>
    %103 = math.exp %102 : vector<8x128xf32>
    %cst_30 = arith.constant dense<0.000000e+00> : vector<8xf32>
    %104 = vector.multi_reduction <add>, %103, %cst_30 [1] : vector<8x128xf32> to vector<8xf32>
    %105 = vector.shape_cast %104 : vector<8xf32> to vector<8x1xf32>
    %106 = math.log %105 : vector<8x1xf32>
    %107 = vector.broadcast %106 : vector<8x1xf32> to vector<8x128xf32>
    %108 = arith.subf %102, %107 : vector<8x128xf32>
    %c0_31 = arith.constant 0 : index
    %c0_32 = arith.constant 0 : index
    %c0_33 = arith.constant 0 : index
    %109 = vector.load %arg10[%c0_31, %c0_32, %c0_33] : memref<1x8x128xf32, #tpu.memory_space<vmem>>, vector<1x8x128xf32>
    %110 = vector.shape_cast %109 : vector<1x8x128xf32> to vector<8x128xf32>
    %111 = vector.shape_cast %108 : vector<8x128xf32> to vector<1x8x128xf32>
    tpu.vector_store %arg10[%c0_31, %c0_32, %c0_33], %111 {strides = array<i32>} : memref<1x8x128xf32, #tpu.memory_space<vmem>>, vector<1x8x128xf32>,
    return
  }
  func.func @transform_0(%arg0: i32, %arg1: i32, %arg2: memref<8x8xi32, #tpu.memory_space<smem>>) -> (i32, i32) {
    %c0_i32 = arith.constant 0 : i32
    %c0_i32_0 = arith.constant 0 : i32
    return %arg0, %c0_i32 : i32, i32
  }
  func.func @transform_1(%arg0: i32, %arg1: i32, %arg2: memref<8x8xi32, #tpu.memory_space<smem>>) -> (i32, i32) {
    %c0_i32 = arith.constant 0 : i32
    %c0_i32_0 = arith.constant 0 : i32
    %c0_i32_1 = arith.constant 0 : i32
    return %c0_i32, %c0_i32_0 : i32, i32
  }
  func.func @transform_2(%arg0: i32, %arg1: i32, %arg2: memref<8x8xi32, #tpu.memory_space<smem>>) -> (i32, i32) {
    %c0_i32 = arith.constant 0 : i32
    %c0_i32_0 = arith.constant 0 : i32
    %c0_i32_1 = arith.constant 0 : i32
    return %c0_i32, %c0_i32_0 : i32, i32
  }
  func.func @transform_3(%arg0: i32, %arg1: i32, %arg2: memref<8x8xi32, #tpu.memory_space<smem>>) -> (i32, i32) {
    %c0_i32 = arith.constant 0 : i32
    %c0_i32_0 = arith.constant 0 : i32
    %c0_i32_1 = arith.constant 0 : i32
    return %c0_i32, %c0_i32_0 : i32, i32
  }
  func.func @transform_4(%arg0: i32, %arg1: i32, %arg2: memref<8x8xi32, #tpu.memory_space<smem>>) -> (i32, i32) {
    %c0_i32 = arith.constant 0 : i32
    %c0_i32_0 = arith.constant 0 : i32
    %c0_i32_1 = arith.constant 0 : i32
    return %c0_i32, %c0_i32_0 : i32, i32
  }
  func.func @transform_5(%arg0: i32, %arg1: i32, %arg2: memref<8x8xi32, #tpu.memory_space<smem>>) -> (i32, i32) {
    %c0_i32 = arith.constant 0 : i32
    %c0_i32_0 = arith.constant 0 : i32
    %c0_i32_1 = arith.constant 0 : i32
    return %c0_i32, %c0_i32_0 : i32, i32
  }
  func.func @transform_6(%arg0: i32, %arg1: i32, %arg2: memref<8x8xi32, #tpu.memory_space<smem>>) -> (i32, i32) {
    %c0_i32 = arith.constant 0 : i32
    %c0_i32_0 = arith.constant 0 : i32
    %c0_i32_1 = arith.constant 0 : i32
    return %c0_i32, %c0_i32_0 : i32, i32
  }
  func.func @transform_7(%arg0: i32, %arg1: i32, %arg2: memref<8x8xi32, #tpu.memory_space<smem>>) -> (i32, i32, i32) {
    %c0_i32 = arith.constant 0 : i32
    %c0_i32_0 = arith.constant 0 : i32
    return %arg1, %arg0, %c0_i32 : i32, i32, i32
  }
  func.func @transform_8(%arg0: i32, %arg1: i32, %arg2: memref<8x8xi32, #tpu.memory_space<smem>>) -> (i32, i32) {
    %c0_i32 = arith.constant 0 : i32
    %c0_i32_0 = arith.constant 0 : i32
    return %arg0, %c0_i32 : i32, i32
  }
}

</mosaic_0001>

<llo_original>
// kernel: tpu_custom_call.1
$region0: #{tpu_custom_call.1}
  #allocation0 [shape = 'u32[]', space=smem, size = 0x4, offset = 0x4, fixed_abs, tag = 'smem constant byte address 0x4 - core index']
  #allocation1 [shape = 'u32[144,128]{1,0:T(1,128)}', space=vmem, size = 0x12000, scoped, tag = 'internal scratch']
  #allocation2 [shape = 'f32[8,128]{1,0:T(8,128)}', space=vmem, size = 0x1000, scoped, tag = 'scratch operand']
  #allocation3 [shape = 's32[1]{0}', space=sflag, size = 0x4, scoped, tag = 'scoped memory for tpu_custom_call.1']
  #allocation4 [shape = 'u8[4096]{0}', space=smem, size = 0x1000, scoped, tag = 'prefetched SMEM operand 0']
  %s0 = inlined_call_operand.hbm [shape: s32[8,8], index: 0, kind: input, shape index: {}]
  %s1 = inlined_call_operand.hbm [shape: f32[8,128], index: 1, kind: input, shape index: {}]
  %s2 = inlined_call_operand.hbm [shape: f32[64,384], index: 2, kind: input, shape index: {}]
  %s3 = inlined_call_operand.hbm [shape: bf16[128,384], index: 3, kind: input, shape index: {}]
  %s4 = inlined_call_operand.vmem [shape: f32[1,384], index: 4, kind: input, shape index: {}]
  %s5 = inlined_call_operand.vmem [shape: f32[1,128], index: 5, kind: input, shape index: {}]
  %s6 = inlined_call_operand.hbm [shape: bf16[128,128], index: 6, kind: input, shape index: {}]
  %s7 = inlined_call_operand.vmem [shape: f32[1,128], index: 7, kind: input, shape index: {}]
  %s8 = inlined_call_operand.hbm [shape: f32[8,8,128], index: 8, kind: output, shape index: {0}]
  %s9 = inlined_call_operand.hbm [shape: f32[8,128], index: 9, kind: output, shape index: {1}]
  %10 = xla_tuple %s8, %s9
  %s11 = sld [smem:[#allocation0]]
  $region93: #{tpu_custom_call.1} parent=0
    _
  %s13 = ssub.s32 1, %s11
  %s14 = scalar_select 0, %s13, %s11
  %16 = dma.hbm_to_smem %s0, 128, [#allocation4], [#allocation3]
  %17 = dma.done [#allocation3], 128
  %18 = sfence
  $region1: #{tpu_custom_call.1} parent=0
    #allocation5 [shape = 'u8[4096]{0}', space=vmem, size = 0x1000, scoped, tag = 'input window, operand 1, single buffered']
    #allocation6 [shape = 's32[2]{0}', space=sflag, size = 0x8, scoped, tag = 'scoped memory for tpu_custom_call.1']
    #allocation7 [shape = 's32[2]{0}', space=sflag, size = 0x8, scoped, tag = 'scoped memory for tpu_custom_call.1']
    #allocation8 [shape = 'u8[98304]{0}', space=vmem, size = 0x18000, scoped, tag = 'input window, operand 2, single buffered']
    #allocation9 [shape = 's32[1]{0}', space=sflag, size = 0x4, scoped, tag = 'scoped memory for tpu_custom_call.1']
    #allocation10 [shape = 'u8[98304]{0}', space=vmem, size = 0x18000, scoped, tag = 'input window, operand 3, single buffered']
    #allocation11 [shape = 'u8[32768]{0}', space=vmem, size = 0x8000, scoped, tag = 'input window, operand 6, single buffered']
    #allocation12 [shape = 's32[1]{0}', space=sflag, size = 0x4, scoped, tag = 'scoped memory for tpu_custom_call.1']
    #allocation13 [shape = 'u8[8192]{0}', space=vmem, size = 0x2000, scoped, tag = 'output window, operand 0']
    #allocation14 [shape = 'u8[4096]{0}', space=vmem, size = 0x1000, scoped, tag = 'output window, operand 1, single buffered']
    #allocation15 [shape = 's32[1]{0}', space=sflag, size = 0x4, scoped, tag = 'scoped memory for tpu_custom_call.1']
    %19 = vsyncpa [#allocation6], 0
    %20 = vsyncpa [#allocation9], 0
    %21 = vsyncpa [#allocation12], 0
    %22 = vsyncpa [#allocation7], 0
    %s23 = scalar_lea.sflag [#allocation7], 1
    %24 = vsyncpa %s23, 0
    %25 = vsyncpa [#allocation15], 0
    loop: start=0, step=1, limit=10
    $region2: #{tpu_custom_call.1} parent=1 // loop_pre_header
      _
    $region3: #{tpu_custom_call.1} parent=1 // loop_header
      %s27 = sphi 0, %s31
      %p28 = scmp.ge.s32.totalorder %s27, 10
      %s34 = sphi 0, %s46
      %s35 = sphi 0, %s42
      %s36 = sphi 0, %s34
      %s37 = sphi 0, %s35
      %s38 = sphi 0, %s36
      %s39 = sphi 0, %s37
      %s49 = sphi 0, %s51
      %s52 = sphi 0, %s49
      %s53 = sphi 0, %s52
      %s69 = sphi 0, %s53
      %s73 = sphi 0, %s73
      %s75 = sphi 0, %s73
      %s76 = sphi 0, %s75
      %s90 = sphi 0, %s76
      %s94 = sphi 0, %s94
      %s96 = sphi 0, %s94
      %s97 = sphi 0, %s96
      %s111 = sphi 0, %s97
      %s115 = sphi 0, %s115
      %s117 = sphi 0, %s115
      %s118 = sphi 0, %s117
      %s132 = sphi 0, %s118
      %s136 = sphi 0, %s136
      %s138 = sphi 0, %s136
      %s139 = sphi 0, %s138
      %s153 = sphi 0, %s139
      %s157 = sphi 0, %s157
      %s159 = sphi 0, %s157
      %s160 = sphi 0, %s159
      %s174 = sphi 0, %s160
      %s178 = sphi 0, %s178
      %s180 = sphi 0, %s178
      %s181 = sphi 0, %s180
      %s195 = sphi 0, %s181
      %s203 = sphi 0, %s205
      %s206 = sphi 0, %s203
      %s207 = sphi 0, %s206
      %s223 = sphi 0, %s207
      %s229 = sphi 0, %s231
      %s232 = sphi 0, %s229
      %s233 = sphi 0, %s232
      %s249 = sphi 0, %s233
    $region4: #{tpu_custom_call.1} parent=1 // loop_header_branch
      %30 = sbr.rel (%p28) target = $region8
    $region5: #{tpu_custom_call.1} parent=1 // loop_body
      %s32 = ssub.s32 %s27, 1
      %s33 = ssub.s32 %s27, 2
      %s40 = sadd.s32 1, %s35
      %p41 = scmp.ge.s32.totalorder %s40, 8
      %s42 = scalar_select %p41, 0, %s40
      %s43 = sadd.s32 1, %s34
      %s44 = scalar_select %p41, %s43, %s34
      %p45 = scmp.ge.s32.totalorder %s44, 1
      %s46 = scalar_select %p45, 0, %s44
      %s47 = ssub.s32 %s34, %s46
      %p48 = scmp.eq.s32.totalorder %s47, 0
      %s50 = sadd.s32 %s49, 1
      %s51 = scalar_select %p48, %s49, %s50
      %p54 = pneg %p48
      %p55 = scmp.eq.s32.totalorder %s27, 7
      %p56 = por %p54, %p55
      %p57 = scmp.ne.s32.totalorder %s49, %s52
      %p58 = scmp.eq.s32.totalorder %s27, 0
      %p59 = por %p57, %p58
      %p60 = scmp.ne.s32.totalorder %s49, %s52
      %p61 = scmp.eq.s32.totalorder %s32, 7
      %p62 = por %p60, %p61
      %p63 = scmp.ne.s32.totalorder %s52, %s53
      %p64 = scmp.eq.s32.totalorder %s32, 0
      %p65 = por %p63, %p64
      %p66 = scmp.ne.s32.totalorder %s52, %s53
      %p67 = scmp.eq.s32.totalorder %s33, 7
      %p68 = por %p66, %p67
      %p70 = scmp.ne.s32.totalorder %s53, %s69
      %p71 = scmp.eq.s32.totalorder %s33, 0
      %p72 = por %p70, %p71
      %s74 = sadd.s32 %s73, 1
      %p77 = scmp.eq.s32.totalorder %s27, 7
      %p78 = scmp.ne.s32.totalorder %s73, %s75
      %p79 = scmp.eq.s32.totalorder %s27, 0
      %p80 = por %p78, %p79
      %p81 = scmp.ne.s32.totalorder %s73, %s75
      %p82 = scmp.eq.s32.totalorder %s32, 7
      %p83 = por %p81, %p82
      %p84 = scmp.ne.s32.totalorder %s75, %s76
      %p85 = scmp.eq.s32.totalorder %s32, 0
      %p86 = por %p84, %p85
      %p87 = scmp.ne.s32.totalorder %s75, %s76
      %p88 = scmp.eq.s32.totalorder %s33, 7
      %p89 = por %p87, %p88
      %p91 = scmp.ne.s32.totalorder %s76, %s90
      %p92 = scmp.eq.s32.totalorder %s33, 0
      %p93 = por %p91, %p92
      %s95 = sadd.s32 %s94, 1
      %p98 = scmp.eq.s32.totalorder %s27, 7
      %p99 = scmp.ne.s32.totalorder %s94, %s96
      %p100 = scmp.eq.s32.totalorder %s27, 0
      %p101 = por %p99, %p100
      %p102 = scmp.ne.s32.totalorder %s94, %s96
      %p103 = scmp.eq.s32.totalorder %s32, 7
      %p104 = por %p102, %p103
      %p105 = scmp.ne.s32.totalorder %s96, %s97
      %p106 = scmp.eq.s32.totalorder %s32, 0
      %p107 = por %p105, %p106
      %p108 = scmp.ne.s32.totalorder %s96, %s97
      %p109 = scmp.eq.s32.totalorder %s33, 7
      %p110 = por %p108, %p109
      %p112 = scmp.ne.s32.totalorder %s97, %s111
      %p113 = scmp.eq.s32.totalorder %s33, 0
      %p114 = por %p112, %p113
      %s116 = sadd.s32 %s115, 1
      %p119 = scmp.eq.s32.totalorder %s27, 7
      %p120 = scmp.ne.s32.totalorder %s115, %s117
      %p121 = scmp.eq.s32.totalorder %s27, 0
      %p122 = por %p120, %p121
      %p123 = scmp.ne.s32.totalorder %s115, %s117
      %p124 = scmp.eq.s32.totalorder %s32, 7
      %p125 = por %p123, %p124
      %p126 = scmp.ne.s32.totalorder %s117, %s118
      %p127 = scmp.eq.s32.totalorder %s32, 0
      %p128 = por %p126, %p127
      %p129 = scmp.ne.s32.totalorder %s117, %s118
      %p130 = scmp.eq.s32.totalorder %s33, 7
      %p131 = por %p129, %p130
      %p133 = scmp.ne.s32.totalorder %s118, %s132
      %p134 = scmp.eq.s32.totalorder %s33, 0
      %p135 = por %p133, %p134
      %s137 = sadd.s32 %s136, 1
      %p140 = scmp.eq.s32.totalorder %s27, 7
      %p141 = scmp.ne.s32.totalorder %s136, %s138
      %p142 = scmp.eq.s32.totalorder %s27, 0
      %p143 = por %p141, %p142
      %p144 = scmp.ne.s32.totalorder %s136, %s138
      %p145 = scmp.eq.s32.totalorder %s32, 7
      %p146 = por %p144, %p145
      %p147 = scmp.ne.s32.totalorder %s138, %s139
      %p148 = scmp.eq.s32.totalorder %s32, 0
      %p149 = por %p147, %p148
      %p150 = scmp.ne.s32.totalorder %s138, %s139
      %p151 = scmp.eq.s32.totalorder %s33, 7
      %p152 = por %p150, %p151
      %p154 = scmp.ne.s32.totalorder %s139, %s153
      %p155 = scmp.eq.s32.totalorder %s33, 0
      %p156 = por %p154, %p155
      %s158 = sadd.s32 %s157, 1
      %p161 = scmp.eq.s32.totalorder %s27, 7
      %p162 = scmp.ne.s32.totalorder %s157, %s159
      %p163 = scmp.eq.s32.totalorder %s27, 0
      %p164 = por %p162, %p163
      %p165 = scmp.ne.s32.totalorder %s157, %s159
      %p166 = scmp.eq.s32.totalorder %s32, 7
      %p167 = por %p165, %p166
      %p168 = scmp.ne.s32.totalorder %s159, %s160
      %p169 = scmp.eq.s32.totalorder %s32, 0
      %p170 = por %p168, %p169
      %p171 = scmp.ne.s32.totalorder %s159, %s160
      %p172 = scmp.eq.s32.totalorder %s33, 7
      %p173 = por %p171, %p172
      %p175 = scmp.ne.s32.totalorder %s160, %s174
      %p176 = scmp.eq.s32.totalorder %s33, 0
      %p177 = por %p175, %p176
      %s179 = sadd.s32 %s178, 1
      %p182 = scmp.eq.s32.totalorder %s27, 7
      %p183 = scmp.ne.s32.totalorder %s178, %s180
      %p184 = scmp.eq.s32.totalorder %s27, 0
      %p185 = por %p183, %p184
      %p186 = scmp.ne.s32.totalorder %s178, %s180
      %p187 = scmp.eq.s32.totalorder %s32, 7
      %p188 = por %p186, %p187
      %p189 = scmp.ne.s32.totalorder %s180, %s181
      %p190 = scmp.eq.s32.totalorder %s32, 0
      %p191 = por %p189, %p190
      %p192 = scmp.ne.s32.totalorder %s180, %s181
      %p193 = scmp.eq.s32.totalorder %s33, 7
      %p194 = por %p192, %p193
      %p196 = scmp.ne.s32.totalorder %s181, %s195
      %p197 = scmp.eq.s32.totalorder %s33, 0
      %p198 = por %p196, %p197
      %s199 = ssub.s32 %s35, %s42
      %s200 = ssub.s32 %s34, %s46
      %s201 = sor.u32 %s199, %s200
      %p202 = scmp.eq.s32.totalorder %s201, 0
      %s204 = sadd.s32 %s203, 1
      %s205 = scalar_select %p202, %s203, %s204
      %p208 = pneg %p202
      %p209 = scmp.eq.s32.totalorder %s27, 7
      %p210 = por %p208, %p209
      %p211 = scmp.ne.s32.totalorder %s203, %s206
      %p212 = scmp.eq.s32.totalorder %s27, 0
      %p213 = por %p211, %p212
      %p214 = scmp.ne.s32.totalorder %s203, %s206
      %p215 = scmp.eq.s32.totalorder %s32, 7
      %p216 = por %p214, %p215
      %p217 = scmp.ne.s32.totalorder %s206, %s207
      %p218 = scmp.eq.s32.totalorder %s32, 0
      %p219 = por %p217, %p218
      %p220 = scmp.ne.s32.totalorder %s206, %s207
      %p221 = scmp.eq.s32.totalorder %s33, 7
      %p222 = por %p220, %p221
      %p224 = scmp.ne.s32.totalorder %s207, %s223
      %p225 = scmp.eq.s32.totalorder %s33, 0
      %p226 = por %p224, %p225
      %s227 = ssub.s32 %s34, %s46
      %p228 = scmp.eq.s32.totalorder %s227, 0
      %s230 = sadd.s32 %s229, 1
      %s231 = scalar_select %p228, %s229, %s230
      %p234 = pneg %p228
      %p235 = scmp.eq.s32.totalorder %s27, 7
      %p236 = por %p234, %p235
      %p237 = scmp.ne.s32.totalorder %s229, %s232
      %p238 = scmp.eq.s32.totalorder %s27, 0
      %p239 = por %p237, %p238
      %p240 = scmp.ne.s32.totalorder %s229, %s232
      %p241 = scmp.eq.s32.totalorder %s32, 7
      %p242 = por %p240, %p241
      %p243 = scmp.ne.s32.totalorder %s232, %s233
      %p244 = scmp.eq.s32.totalorder %s32, 0
      %p245 = por %p243, %p244
      %p246 = scmp.ne.s32.totalorder %s232, %s233
      %p247 = scmp.eq.s32.totalorder %s33, 7
      %p248 = por %p246, %p247
      %p250 = scmp.ne.s32.totalorder %s233, %s249
      %p251 = scmp.eq.s32.totalorder %s33, 0
      %p252 = por %p250, %p251
      %p253 = scmp.le.s32.totalorder 1, %s27
      %p254 = scmp.lt.s32.totalorder %s27, 9
      %p255 = pnand %p253, %p254
      %p256 = pneg %p255
      // Predicated region
      $region9: #{tpu_custom_call.1} parent=5 // pred_check
        _
      $region10: #{tpu_custom_call.1} parent=5 // pred_check_branch
        %258 = sbr.rel (%p255) target = $region12
      $region11: #{tpu_custom_call.1} parent=5 // pred_region
        %s259 = ssub.s32 %s27, 1
        // Predicated region
        $region13: #{tpu_custom_call.1} parent=11 // pred_check
          %p260 = pneg %p65
        $region14: #{tpu_custom_call.1} parent=11 // pred_check_branch
          %262 = sbr.rel (%p260) target = $region16
        $region15: #{tpu_custom_call.1} parent=11 // pred_region
          %s264 = ssub.s32 128, 128
          %265 = vsyncadd [#allocation6], %s264
          %s266 = smul.addr %s36, 128
          %s267 = scalar_lea.hbm %s1, %s266
          %s269 = sshll.u32 [#allocation5], 4
          %s270 = int_to_ptr.vmem [resolvable:$true] %s269
          %272 = dma.hbm_to_vmem [thread:$0]  %s267, 128, %s270, [#allocation6]
        $region16: #{tpu_custom_call.1} parent=11 // pred_fallthru
          _
        // Predicated region
        $region17: #{tpu_custom_call.1} parent=11 // pred_check
          %p273 = pneg %p86
        $region18: #{tpu_custom_call.1} parent=11 // pred_check_branch
          %275 = sbr.rel (%p273) target = $region20
        $region19: #{tpu_custom_call.1} parent=11 // pred_region
          %s277 = ssub.s32 3072, 3072
          %278 = vsyncadd [#allocation9], %s277
          %s279 = sshll.u32 [#allocation8], 4
          %s280 = int_to_ptr.vmem [resolvable:$true] %s279
          %285 = dma.hbm_to_vmem [thread:$0]  %s2, 3072, %s280, [#allocation9], 384, 384, 24
        $region20: #{tpu_custom_call.1} parent=11 // pred_fallthru
          _
        // Predicated region
        $region21: #{tpu_custom_call.1} parent=11 // pred_check
          %p286 = pneg %p107
        $region22: #{tpu_custom_call.1} parent=11 // pred_check_branch
          %288 = sbr.rel (%p286) target = $region24
        $region23: #{tpu_custom_call.1} parent=11 // pred_region
          %s290 = ssub.s32 3072, 3072
          %291 = vsyncadd [#allocation9], %s290
          %s292 = sshll.u32 [#allocation10], 4
          %s293 = int_to_ptr.vmem [resolvable:$true] %s292
          %298 = dma.hbm_to_vmem [thread:$0]  %s3, 3072, %s293, [#allocation9], 192, 192, 12
        $region24: #{tpu_custom_call.1} parent=11 // pred_fallthru
          _
        // Predicated region
        $region25: #{tpu_custom_call.1} parent=11 // pred_check
          %p299 = pneg %p128
        $region26: #{tpu_custom_call.1} parent=11 // pred_check_branch
          %301 = sbr.rel (%p299) target = $region28
        $region27: #{tpu_custom_call.1} parent=11 // pred_region
          _
        $region28: #{tpu_custom_call.1} parent=11 // pred_fallthru
          _
        // Predicated region
        $region29: #{tpu_custom_call.1} parent=11 // pred_check
          %p302 = pneg %p149
        $region30: #{tpu_custom_call.1} parent=11 // pred_check_branch
          %304 = sbr.rel (%p302) target = $region32
        $region31: #{tpu_custom_call.1} parent=11 // pred_region
          _
        $region32: #{tpu_custom_call.1} parent=11 // pred_fallthru
          _
        // Predicated region
        $region33: #{tpu_custom_call.1} parent=11 // pred_check
          %p305 = pneg %p170
        $region34: #{tpu_custom_call.1} parent=11 // pred_check_branch
          %307 = sbr.rel (%p305) target = $region36
        $region35: #{tpu_custom_call.1} parent=11 // pred_region
          %s309 = ssub.s32 1024, 1024
          %310 = vsyncadd [#allocation12], %s309
          %s311 = sshll.u32 [#allocation11], 4
          %s312 = int_to_ptr.vmem [resolvable:$true] %s311
          %317 = dma.hbm_to_vmem [thread:$0]  %s6, 1024, %s312, [#allocation12], 64, 64, 4
        $region36: #{tpu_custom_call.1} parent=11 // pred_fallthru
          _
        // Predicated region
        $region37: #{tpu_custom_call.1} parent=11 // pred_check
          %p318 = pneg %p191
        $region38: #{tpu_custom_call.1} parent=11 // pred_check_branch
          %320 = sbr.rel (%p318) target = $region40
        $region39: #{tpu_custom_call.1} parent=11 // pred_region
          _
        $region40: #{tpu_custom_call.1} parent=11 // pred_fallthru
          _
      $region12: #{tpu_custom_call.1} parent=5 // pred_fallthru
        _
      %p321 = scmp.lt.s32.totalorder %s27, 8
      // Predicated region
      $region41: #{tpu_custom_call.1} parent=5 // pred_check
        %p322 = pneg %p321
      $region42: #{tpu_custom_call.1} parent=5 // pred_check_branch
        %324 = sbr.rel (%p322) target = $region44
      $region43: #{tpu_custom_call.1} parent=5 // pred_region
        _
      $region44: #{tpu_custom_call.1} parent=5 // pred_fallthru
        _
      %p325 = scmp.le.s32.totalorder 1, %s27
      %p326 = scmp.lt.s32.totalorder %s27, 9
      %p327 = pnand %p325, %p326
      %p328 = pneg %p327
      // Predicated region
      $region45: #{tpu_custom_call.1} parent=5 // pred_check
        _
      $region46: #{tpu_custom_call.1} parent=5 // pred_check_branch
        %330 = sbr.rel (%p327) target = $region48
      $region47: #{tpu_custom_call.1} parent=5 // pred_region
        %s331 = ssub.s32 %s27, 1
        // Predicated region
        $region49: #{tpu_custom_call.1} parent=47 // pred_check
          %p332 = pneg %p65
        $region50: #{tpu_custom_call.1} parent=47 // pred_check_branch
          %334 = sbr.rel (%p332) target = $region52
        $region51: #{tpu_custom_call.1} parent=47 // pred_region
          %335 = dma.done [#allocation6], 128
        $region52: #{tpu_custom_call.1} parent=47 // pred_fallthru
          _
        // Predicated region
        $region53: #{tpu_custom_call.1} parent=47 // pred_check
          %p336 = pneg %p86
        $region54: #{tpu_custom_call.1} parent=47 // pred_check_branch
          %338 = sbr.rel (%p336) target = $region56
        $region55: #{tpu_custom_call.1} parent=47 // pred_region
          %339 = dma.done [#allocation9], 3072
        $region56: #{tpu_custom_call.1} parent=47 // pred_fallthru
          _
        // Predicated region
        $region57: #{tpu_custom_call.1} parent=47 // pred_check
          %p340 = pneg %p107
        $region58: #{tpu_custom_call.1} parent=47 // pred_check_branch
          %342 = sbr.rel (%p340) target = $region60
        $region59: #{tpu_custom_call.1} parent=47 // pred_region
          %343 = dma.done [#allocation9], 3072
        $region60: #{tpu_custom_call.1} parent=47 // pred_fallthru
          _
        // Predicated region
        $region61: #{tpu_custom_call.1} parent=47 // pred_check
          %p344 = pneg %p170
        $region62: #{tpu_custom_call.1} parent=47 // pred_check_branch
          %346 = sbr.rel (%p344) target = $region64
        $region63: #{tpu_custom_call.1} parent=47 // pred_region
          %347 = dma.done [#allocation12], 1024
        $region64: #{tpu_custom_call.1} parent=47 // pred_fallthru
          _
        %p348 = pneg %p65
        %p349 = pneg %p62
        %p350 = pneg %p86
        %p351 = pneg %p83
        %p352 = pneg %p107
        %p353 = pneg %p104
        %p354 = pneg %p128
        %p355 = pneg %p125
        %p356 = pneg %p149
        %p357 = pneg %p146
        %p358 = pneg %p170
        %p359 = pneg %p167
        %p360 = pneg %p191
        %p361 = pneg %p188
        %p362 = pneg %p219
        %p363 = pneg %p216
        %s364 = sand.u32 %s206, 1
        %s365 = scalar_lea.sflag [#allocation7], %s364
        %s366 = sand.u32 %s206, 1
        %s367 = smul.addr %s366, 8
        %s368 = scalar_lea.vmem [#allocation13], %s367
        %p369 = pneg %p245
        %p370 = pneg %p242
        %p372 = scmp.eq.s32.totalorder %s37, 0
        // Predicated region
        $region65: #{tpu_custom_call.1} parent=47 // pred_check
          %p373 = pneg %p372
        $region66: #{tpu_custom_call.1} parent=47 // pred_check_branch
          %375 = sbr.rel (%p373) target = $region68
        $region67: #{tpu_custom_call.1} parent=47 // pred_region
          %v376 = vld [vmem:[#allocation5] sm:$0xff]
          %377 = vst [vmem:[#allocation2] sm:$0xff] %v376
        $region68: #{tpu_custom_call.1} parent=47 // pred_fallthru
          _
        %v378 = vld [vmem:[#allocation2] sm:$0xff]
        %s379 = smul.u32 %s36, 8
        %s380 = sshra.s32 %s379, 7
        %s381 = sand.u32 %s379, 127
        %s382 = sadd.s32 %s380, %s37
        %s383 = smul.u32 %s382, 128
        %s384 = sshra.s32 %s379, 7
        %s385 = sand.u32 %s379, 127
        %s386 = sadd.s32 %s383, %s385
        %s387 = sld [smem:[#allocation4 + %s386]]
        %s388 = sshra.s32 %s387, 3
        %s389 = sand.u32 %s387, 7
        %s390 = sshra.s32 %s387, 3
        %s391 = sand.u32 %s387, 7
        %s392 = smul.u32 %s388, 3
        %s393 = smul.u32 %s392, 8
        %s394 = sadd.s32 %s393, %s391
        %s395 = scalar_lea.vmem [#allocation8], %s394
        %v396 = vld [vmem:[%s395] ss:$8 sm:$0x7]
        %s397 = sadd.s32 %s379, 1
        %s398 = sshra.s32 %s397, 7
        %s399 = sand.u32 %s397, 127
        %s400 = sadd.s32 %s398, %s37
        %s401 = smul.u32 %s400, 128
        %s402 = sshra.s32 %s397, 7
        %s403 = sand.u32 %s397, 127
        %s404 = sadd.s32 %s401, %s403
        %s405 = sld [smem:[#allocation4 + %s404]]
        %s406 = sshra.s32 %s405, 3
        %s407 = sand.u32 %s405, 7
        %s408 = sshra.s32 %s405, 3
        %s409 = sand.u32 %s405, 7
        %s410 = smul.u32 %s406, 3
        %s411 = smul.u32 %s410, 8
        %s412 = sadd.s32 %s411, %s409
        %s413 = scalar_lea.vmem [#allocation8], %s412
        %v414 = vld [vmem:[%s413] ss:$8 sm:$0x7]
        %s415 = sadd.s32 %s379, 2
        %s416 = sshra.s32 %s415, 7
        %s417 = sand.u32 %s415, 127
        %s418 = sadd.s32 %s416, %s37
        %s419 = smul.u32 %s418, 128
        %s420 = sshra.s32 %s415, 7
        %s421 = sand.u32 %s415, 127
        %s422 = sadd.s32 %s419, %s421
        %s423 = sld [smem:[#allocation4 + %s422]]
        %s424 = sshra.s32 %s423, 3
        %s425 = sand.u32 %s423, 7
        %s426 = sshra.s32 %s423, 3
        %s427 = sand.u32 %s423, 7
        %s428 = smul.u32 %s424, 3
        %s429 = smul.u32 %s428, 8
        %s430 = sadd.s32 %s429, %s427
        %s431 = scalar_lea.vmem [#allocation8], %s430
        %v432 = vld [vmem:[%s431] ss:$8 sm:$0x7]
        %s433 = sadd.s32 %s379, 3
        %s434 = sshra.s32 %s433, 7
        %s435 = sand.u32 %s433, 127
        %s436 = sadd.s32 %s434, %s37
        %s437 = smul.u32 %s436, 128
        %s438 = sshra.s32 %s433, 7
        %s439 = sand.u32 %s433, 127
        %s440 = sadd.s32 %s437, %s439
        %s441 = sld [smem:[#allocation4 + %s440]]
        %s442 = sshra.s32 %s441, 3
        %s443 = sand.u32 %s441, 7
        %s444 = sshra.s32 %s441, 3
        %s445 = sand.u32 %s441, 7
        %s446 = smul.u32 %s442, 3
        %s447 = smul.u32 %s446, 8
        %s448 = sadd.s32 %s447, %s445
        %s449 = scalar_lea.vmem [#allocation8], %s448
        %v450 = vld [vmem:[%s449] ss:$8 sm:$0x7]
        %s451 = sadd.s32 %s379, 4
        %s452 = sshra.s32 %s451, 7
        %s453 = sand.u32 %s451, 127
        %s454 = sadd.s32 %s452, %s37
        %s455 = smul.u32 %s454, 128
        %s456 = sshra.s32 %s451, 7
        %s457 = sand.u32 %s451, 127
        %s458 = sadd.s32 %s455, %s457
        %s459 = sld [smem:[#allocation4 + %s458]]
        %s460 = sshra.s32 %s459, 3
        %s461 = sand.u32 %s459, 7
        %s462 = sshra.s32 %s459, 3
        %s463 = sand.u32 %s459, 7
        %s464 = smul.u32 %s460, 3
        %s465 = smul.u32 %s464, 8
        %s466 = sadd.s32 %s465, %s463
        %s467 = scalar_lea.vmem [#allocation8], %s466
        %v468 = vld [vmem:[%s467] ss:$8 sm:$0x7]
        %s469 = sadd.s32 %s379, 5
        %s470 = sshra.s32 %s469, 7
        %s471 = sand.u32 %s469, 127
        %s472 = sadd.s32 %s470, %s37
        %s473 = smul.u32 %s472, 128
        %s474 = sshra.s32 %s469, 7
        %s475 = sand.u32 %s469, 127
        %s476 = sadd.s32 %s473, %s475
        %s477 = sld [smem:[#allocation4 + %s476]]
        %s478 = sshra.s32 %s477, 3
        %s479 = sand.u32 %s477, 7
        %s480 = sshra.s32 %s477, 3
        %s481 = sand.u32 %s477, 7
        %s482 = smul.u32 %s478, 3
        %s483 = smul.u32 %s482, 8
        %s484 = sadd.s32 %s483, %s481
        %s485 = scalar_lea.vmem [#allocation8], %s484
        %v486 = vld [vmem:[%s485] ss:$8 sm:$0x7]
        %s487 = sadd.s32 %s379, 6
        %s488 = sshra.s32 %s487, 7
        %s489 = sand.u32 %s487, 127
        %s490 = sadd.s32 %s488, %s37
        %s491 = smul.u32 %s490, 128
        %s492 = sshra.s32 %s487, 7
        %s493 = sand.u32 %s487, 127
        %s494 = sadd.s32 %s491, %s493
        %s495 = sld [smem:[#allocation4 + %s494]]
        %s496 = sshra.s32 %s495, 3
        %s497 = sand.u32 %s495, 7
        %s498 = sshra.s32 %s495, 3
        %s499 = sand.u32 %s495, 7
        %s500 = smul.u32 %s496, 3
        %s501 = smul.u32 %s500, 8
        %s502 = sadd.s32 %s501, %s499
        %s503 = scalar_lea.vmem [#allocation8], %s502
        %v504 = vld [vmem:[%s503] ss:$8 sm:$0x7]
        %s505 = sadd.s32 %s379, 7
        %s506 = sshra.s32 %s505, 7
        %s507 = sand.u32 %s505, 127
        %s508 = sadd.s32 %s506, %s37
        %s509 = smul.u32 %s508, 128
        %s510 = sshra.s32 %s505, 7
        %s511 = sand.u32 %s505, 127
        %s512 = sadd.s32 %s509, %s511
        %s513 = sld [smem:[#allocation4 + %s512]]
        %s514 = sshra.s32 %s513, 3
        %s515 = sand.u32 %s513, 7
        %s516 = sshra.s32 %s513, 3
        %s517 = sand.u32 %s513, 7
        %s518 = smul.u32 %s514, 3
        %s519 = smul.u32 %s518, 8
        %s520 = sadd.s32 %s519, %s517
        %s521 = scalar_lea.vmem [#allocation8], %s520
        %v522 = vld [vmem:[%s521] ss:$8 sm:$0x7]
        %v524 = vlaneseq
        %v525 = vshrl.u32 %v524, 7
        %v526 = vsub.s32 0, %v525
        %v527 = vrot.slane %v396, %v526
        %v528 = vlaneseq
        %v529 = vshrl.u32 %v528, 7
        %v530 = vsub.s32 1, %v529
        %v531 = vrot.slane %v396, %v530
        %v532 = vlaneseq
        %v533 = vshrl.u32 %v532, 7
        %v534 = vsub.s32 2, %v533
        %v535 = vrot.slane %v396, %v534
        %v540 = vlaneseq
        %v541 = vshrl.u32 %v540, 7
        %v542 = vsub.s32 0, %v541
        %v543 = vrot.slane %v414, %v542
        %v544 = vlaneseq
        %v545 = vshrl.u32 %v544, 7
        %v546 = vsub.s32 1, %v545
        %v547 = vrot.slane %v414, %v546
        %v548 = vlaneseq
        %v549 = vshrl.u32 %v548, 7
        %v550 = vsub.s32 2, %v549
        %v551 = vrot.slane %v414, %v550
        %v556 = vlaneseq
        %v557 = vshrl.u32 %v556, 7
        %v558 = vsub.s32 0, %v557
        %v559 = vrot.slane %v432, %v558
        %v560 = vlaneseq
        %v561 = vshrl.u32 %v560, 7
        %v562 = vsub.s32 1, %v561
        %v563 = vrot.slane %v432, %v562
        %v564 = vlaneseq
        %v565 = vshrl.u32 %v564, 7
        %v566 = vsub.s32 2, %v565
        %v567 = vrot.slane %v432, %v566
        %v572 = vlaneseq
        %v573 = vshrl.u32 %v572, 7
        %v574 = vsub.s32 0, %v573
        %v575 = vrot.slane %v450, %v574
        %v576 = vlaneseq
        %v577 = vshrl.u32 %v576, 7
        %v578 = vsub.s32 1, %v577
        %v579 = vrot.slane %v450, %v578
        %v580 = vlaneseq
        %v581 = vshrl.u32 %v580, 7
        %v582 = vsub.s32 2, %v581
        %v583 = vrot.slane %v450, %v582
        %v588 = vlaneseq
        %v589 = vshrl.u32 %v588, 7
        %v590 = vsub.s32 0, %v589
        %v591 = vrot.slane %v468, %v590
        %v592 = vlaneseq
        %v593 = vshrl.u32 %v592, 7
        %v594 = vsub.s32 1, %v593
        %v595 = vrot.slane %v468, %v594
        %v596 = vlaneseq
        %v597 = vshrl.u32 %v596, 7
        %v598 = vsub.s32 2, %v597
        %v599 = vrot.slane %v468, %v598
        %v604 = vlaneseq
        %v605 = vshrl.u32 %v604, 7
        %v606 = vsub.s32 0, %v605
        %v607 = vrot.slane %v486, %v606
        %v608 = vlaneseq
        %v609 = vshrl.u32 %v608, 7
        %v610 = vsub.s32 1, %v609
        %v611 = vrot.slane %v486, %v610
        %v612 = vlaneseq
        %v613 = vshrl.u32 %v612, 7
        %v614 = vsub.s32 2, %v613
        %v615 = vrot.slane %v486, %v614
        %v620 = vlaneseq
        %v621 = vshrl.u32 %v620, 7
        %v622 = vsub.s32 0, %v621
        %v623 = vrot.slane %v504, %v622
        %v624 = vlaneseq
        %v625 = vshrl.u32 %v624, 7
        %v626 = vsub.s32 1, %v625
        %v627 = vrot.slane %v504, %v626
        %v628 = vlaneseq
        %v629 = vshrl.u32 %v628, 7
        %v630 = vsub.s32 2, %v629
        %v631 = vrot.slane %v504, %v630
        %v636 = vlaneseq
        %v637 = vshrl.u32 %v636, 7
        %v638 = vsub.s32 0, %v637
        %v639 = vrot.slane %v522, %v638
        %v640 = vlaneseq
        %v641 = vshrl.u32 %v640, 7
        %v642 = vsub.s32 1, %v641
        %v643 = vrot.slane %v522, %v642
        %v644 = vlaneseq
        %v645 = vshrl.u32 %v644, 7
        %v646 = vsub.s32 2, %v645
        %v647 = vrot.slane %v522, %v646
        %vm651 = vcmask 1040384
        %v652 = vsel %vm651, %v527, %v543
        %v653 = vsel %vm651, %v531, %v547
        %v654 = vsel %vm651, %v535, %v551
        %vm655 = vcmask 1041408
        %v656 = vsel %vm655, %v652, %v559
        %v657 = vsel %vm655, %v653, %v563
        %v658 = vsel %vm655, %v654, %v567
        %vm659 = vcmask 1042432
        %v660 = vsel %vm659, %v656, %v575
        %v661 = vsel %vm659, %v657, %v579
        %v662 = vsel %vm659, %v658, %v583
        %vm663 = vcmask 1043456
        %v664 = vsel %vm663, %v660, %v591
        %v665 = vsel %vm663, %v661, %v595
        %v666 = vsel %vm663, %v662, %v599
        %vm667 = vcmask 1044480
        %v668 = vsel %vm667, %v664, %v607
        %v669 = vsel %vm667, %v665, %v611
        %v670 = vsel %vm667, %v666, %v615
        %vm671 = vcmask 1045504
        %v672 = vsel %vm671, %v668, %v623
        %v673 = vsel %vm671, %v669, %v627
        %v674 = vsel %vm671, %v670, %v631
        %vm675 = vcmask 1046528
        %v676 = vsel %vm675, %v672, %v639
        %v677 = vsel %vm675, %v673, %v643
        %v678 = vsel %vm675, %v674, %v647
        %v679 = vld [vmem:[%s4] sm:$0x7]
        %v681 = vlaneseq
        %v682 = vshrl.u32 %v681, 7
        %v683 = vsub.s32 0, %v682
        %v684 = vrot.slane %v679, %v683
        %v685 = vlaneseq
        %v686 = vshrl.u32 %v685, 7
        %v687 = vsub.s32 1, %v686
        %v688 = vrot.slane %v679, %v687
        %v689 = vlaneseq
        %v690 = vshrl.u32 %v689, 7
        %v691 = vsub.s32 2, %v690
        %v692 = vrot.slane %v679, %v691
        %v696 = vadd.f32 %v676, %v684
        %v697 = vadd.f32 %v677, %v688
        %v698 = vadd.f32 %v678, %v692
        %v699 = vpack.c.bf16 %v378, %v378
        %v700 = vld [vmem:[#allocation10] sm:$0xff]
        %v701 = vld [vmem:[#allocation10 + $0x8] sm:$0xf]
        %v702 = vld [vmem:[#allocation10 + $0xc] sm:$0xff]
        %v703 = vld [vmem:[#allocation10 + $0x14] sm:$0xf]
        %v704 = vld [vmem:[#allocation10 + $0x18] sm:$0xff]
        %v705 = vld [vmem:[#allocation10 + $0x20] sm:$0xf]
        %v706 = vld [vmem:[#allocation10 + $0x24] sm:$0xff]
        %v707 = vld [vmem:[#allocation10 + $0x2c] sm:$0xf]
        %v708 = vld [vmem:[#allocation10 + $0x30] sm:$0xff]
        %v709 = vld [vmem:[#allocation10 + $0x38] sm:$0xf]
        %v710 = vld [vmem:[#allocation10 + $0x3c] sm:$0xff]
        %v711 = vld [vmem:[#allocation10 + $0x44] sm:$0xf]
        %v712 = vld [vmem:[#allocation10 + $0x48] sm:$0xff]
        %v713 = vld [vmem:[#allocation10 + $0x50] sm:$0xf]
        %v714 = vld [vmem:[#allocation10 + $0x54] sm:$0xff]
        %v715 = vld [vmem:[#allocation10 + $0x5c] sm:$0xf]
        %v716 = vld [vmem:[#allocation10 + $0x60] sm:$0xff]
        %v717 = vld [vmem:[#allocation10 + $0x68] sm:$0xf]
        %v718 = vld [vmem:[#allocation10 + $0x6c] sm:$0xff]
        %v719 = vld [vmem:[#allocation10 + $0x74] sm:$0xf]
        %v720 = vld [vmem:[#allocation10 + $0x78] sm:$0xff]
        %v721 = vld [vmem:[#allocation10 + $0x80] sm:$0xf]
        %v722 = vld [vmem:[#allocation10 + $0x84] sm:$0xff]
        %v723 = vld [vmem:[#allocation10 + $0x8c] sm:$0xf]
        %v724 = vld [vmem:[#allocation10 + $0x90] sm:$0xff]
        %v725 = vld [vmem:[#allocation10 + $0x98] sm:$0xf]
        %v726 = vld [vmem:[#allocation10 + $0x9c] sm:$0xff]
        %v727 = vld [vmem:[#allocation10 + $0xa4] sm:$0xf]
        %v728 = vld [vmem:[#allocation10 + $0xa8] sm:$0xff]
        %v729 = vld [vmem:[#allocation10 + $0xb0] sm:$0xf]
        %v730 = vld [vmem:[#allocation10 + $0xb4] sm:$0xff]
        %v731 = vld [vmem:[#allocation10 + $0xbc] sm:$0xf]
        %v764 = vunpack.c.l.b16 %v700
        %v765 = vunpack.c.h.b16 %v700
        %v766 = vunpack.c.l.b16 %v701
        %v767 = vunpack.c.l.b16 %v702
        %v768 = vunpack.c.h.b16 %v702
        %v769 = vunpack.c.l.b16 %v703
        %v770 = vunpack.c.l.b16 %v704
        %v771 = vunpack.c.h.b16 %v704
        %v772 = vunpack.c.l.b16 %v705
        %v773 = vunpack.c.l.b16 %v706
        %v774 = vunpack.c.h.b16 %v706
        %v775 = vunpack.c.l.b16 %v707
        %v776 = vunpack.c.l.b16 %v708
        %v777 = vunpack.c.h.b16 %v708
        %v778 = vunpack.c.l.b16 %v709
        %v779 = vunpack.c.l.b16 %v710
        %v780 = vunpack.c.h.b16 %v710
        %v781 = vunpack.c.l.b16 %v711
        %v782 = vunpack.c.l.b16 %v712
        %v783 = vunpack.c.h.b16 %v712
        %v784 = vunpack.c.l.b16 %v713
        %v785 = vunpack.c.l.b16 %v714
        %v786 = vunpack.c.h.b16 %v714
        %v787 = vunpack.c.l.b16 %v715
        %v788 = vunpack.c.l.b16 %v716
        %v789 = vunpack.c.h.b16 %v716
        %v790 = vunpack.c.l.b16 %v717
        %v791 = vunpack.c.l.b16 %v718
        %v792 = vunpack.c.h.b16 %v718
        %v793 = vunpack.c.l.b16 %v719
        %v794 = vunpack.c.l.b16 %v720
        %v795 = vunpack.c.h.b16 %v720
        %v796 = vunpack.c.l.b16 %v721
        %v797 = vunpack.c.l.b16 %v722
        %v798 = vunpack.c.h.b16 %v722
        %v799 = vunpack.c.l.b16 %v723
        %v800 = vunpack.c.l.b16 %v724
        %v801 = vunpack.c.h.b16 %v724
        %v802 = vunpack.c.l.b16 %v725
        %v803 = vunpack.c.l.b16 %v726
        %v804 = vunpack.c.h.b16 %v726
        %v805 = vunpack.c.l.b16 %v727
        %v806 = vunpack.c.l.b16 %v728
        %v807 = vunpack.c.h.b16 %v728
        %v808 = vunpack.c.l.b16 %v729
        %v809 = vunpack.c.l.b16 %v730
        %v810 = vunpack.c.h.b16 %v730
        %v811 = vunpack.c.l.b16 %v731
        %v812 = vpack.c.b16 %v767, %v764
        %v813 = vpack.c.b16 %v768, %v765
        %v814 = vpack.c.b16 %v769, %v766
        %v815 = vpack.c.b16 %v773, %v770
        %v816 = vpack.c.b16 %v774, %v771
        %v817 = vpack.c.b16 %v775, %v772
        %v818 = vpack.c.b16 %v779, %v776
        %v819 = vpack.c.b16 %v780, %v777
        %v820 = vpack.c.b16 %v781, %v778
        %v821 = vpack.c.b16 %v785, %v782
        %v822 = vpack.c.b16 %v786, %v783
        %v823 = vpack.c.b16 %v787, %v784
        %v824 = vpack.c.b16 %v791, %v788
        %v825 = vpack.c.b16 %v792, %v789
        %v826 = vpack.c.b16 %v793, %v790
        %v827 = vpack.c.b16 %v797, %v794
        %v828 = vpack.c.b16 %v798, %v795
        %v829 = vpack.c.b16 %v799, %v796
        %v830 = vpack.c.b16 %v803, %v800
        %v831 = vpack.c.b16 %v804, %v801
        %v832 = vpack.c.b16 %v805, %v802
        %v833 = vpack.c.b16 %v809, %v806
        %v834 = vpack.c.b16 %v810, %v807
        %v835 = vpack.c.b16 %v811, %v808
        %860 = vmatprep.subr.bf16.mxu0 %v813
        %861 = vmatpush1.bf16.msra.mxu0 %v812
        %862 = vmatprep.subr.bf16.mxu0 %v816
        %863 = vmatpush1.bf16.msra.mxu0 %v815
        %864 = vmatprep.subr.bf16.mxu0 %v819
        %865 = vmatpush1.bf16.msra.mxu0 %v818
        %866 = vmatprep.subr.bf16.mxu0 %v822
        %867 = vmatpush1.bf16.msra.mxu0 %v821
        %868 = vmatprep.subr.bf16.mxu0 %v825
        %869 = vmatpush1.bf16.msra.mxu0 %v824
        %870 = vmatprep.subr.bf16.mxu0 %v828
        %871 = vmatpush1.bf16.msra.mxu0 %v827
        %872 = vmatprep.subr.bf16.mxu0 %v831
        %873 = vmatpush1.bf16.msra.mxu0 %v830
        %874 = vmatprep.subr.bf16.mxu0 %v834
        %875 = vmatpush1.bf16.msra.mxu0 %v833
        %876 = vmatprep.subr.bf16.mxu0 0
        %877 = vmatpush1.bf16.msra.mxu0 0
        %878 = vmatprep.subr.bf16.mxu0 0
        %879 = vmatpush1.bf16.msra.mxu0 0
        %880 = vmatprep.subr.bf16.mxu0 0
        %881 = vmatpush1.bf16.msra.mxu0 0
        %882 = vmatprep.subr.bf16.mxu0 0
        %883 = vmatpush1.bf16.msra.mxu0 0
        %884 = vmatprep.subr.bf16.mxu0 0
        %885 = vmatpush1.bf16.msra.mxu0 0
        %886 = vmatprep.subr.bf16.mxu0 0
        %887 = vmatpush1.bf16.msra.mxu0 0
        %888 = vmatprep.subr.bf16.mxu0 0
        %889 = vmatpush1.bf16.msra.mxu0 0
        %890 = vmatprep.subr.bf16.mxu0 0
        %891 = vmatpush1.bf16.msra.mxu0 0
        %892 = vmatprep.mubr.bf16.mxu0 0
        %893 = vmatmul.mubr.bf16.gmra.mrb[0].mxu0 %v699
        %v894 = vpop.f32.mrb[0].mxu0
        %v895 = vadd.f32 0.0, %v894
        %v896 = vpop.f32.mrb[0].mxu0
        %v897 = vadd.f32 0.0, %v896
        %v898 = vpop.f32.mrb[0].mxu0
        %v899 = vpop.f32.mrb[0].mxu0
        %900 = vdwg.mxu0
        %901 = vmatprep.subr.bf16.mxu0 0
        %902 = vmatpush1.bf16.msra.mxu0 %v814
        %903 = vmatprep.subr.bf16.mxu0 0
        %904 = vmatpush1.bf16.msra.mxu0 %v817
        %905 = vmatprep.subr.bf16.mxu0 0
        %906 = vmatpush1.bf16.msra.mxu0 %v820
        %907 = vmatprep.subr.bf16.mxu0 0
        %908 = vmatpush1.bf16.msra.mxu0 %v823
        %909 = vmatprep.subr.bf16.mxu0 0
        %910 = vmatpush1.bf16.msra.mxu0 %v826
        %911 = vmatprep.subr.bf16.mxu0 0
        %912 = vmatpush1.bf16.msra.mxu0 %v829
        %913 = vmatprep.subr.bf16.mxu0 0
        %914 = vmatpush1.bf16.msra.mxu0 %v832
        %915 = vmatprep.subr.bf16.mxu0 0
        %916 = vmatpush1.bf16.msra.mxu0 %v835
        %917 = vmatprep.subr.bf16.mxu0 0
        %918 = vmatpush1.bf16.msra.mxu0 0
        %919 = vmatprep.subr.bf16.mxu0 0
        %920 = vmatpush1.bf16.msra.mxu0 0
        %921 = vmatprep.subr.bf16.mxu0 0
        %922 = vmatpush1.bf16.msra.mxu0 0
        %923 = vmatprep.subr.bf16.mxu0 0
        %924 = vmatpush1.bf16.msra.mxu0 0
        %925 = vmatprep.subr.bf16.mxu0 0
        %926 = vmatpush1.bf16.msra.mxu0 0
        %927 = vmatprep.subr.bf16.mxu0 0
        %928 = vmatpush1.bf16.msra.mxu0 0
        %929 = vmatprep.subr.bf16.mxu0 0
        %930 = vmatpush1.bf16.msra.mxu0 0
        %931 = vmatprep.subr.bf16.mxu0 0
        %932 = vmatpush1.bf16.msra.mxu0 0
        %933 = vmatprep.mubr.bf16.mxu0 0
        %934 = vmatmul.mubr.bf16.gmra.mrb[0].mxu0 %v699
        %v935 = vpop.f32.mrb[0].mxu0
        %v936 = vadd.f32 0.0, %v935
        %v937 = vpop.f32.mrb[0].mxu0
        %v938 = vpop.f32.mrb[0].mxu0
        %v939 = vpop.f32.mrb[0].mxu0
        %940 = vdwg.mxu0
        %v941 = vadd.f32 %v696, %v895
        %v942 = vxor.u32 %v941, 2147483648
        %v943 = vmul.f32 %v942, 1.442695
        %v944 = vpow.pop %v943
        %v945 = vadd.f32 %v944, 1.0
        %v946 = vrcp.pop %v945
        %v947 = vmul.f32 1.0, %v946
        %v948 = vadd.f32 %v697, %v897
        %v949 = vxor.u32 %v948, 2147483648
        %v950 = vmul.f32 %v949, 1.442695
        %v951 = vpow.pop %v950
        %v952 = vadd.f32 %v951, 1.0
        %v953 = vrcp.pop %v952
        %v954 = vmul.f32 1.0, %v953
        %v955 = vld [vmem:[%s5] sm:$0x1]
        %v957 = vlaneseq
        %v958 = vshrl.u32 %v957, 7
        %v959 = vsub.s32 0, %v958
        %v960 = vrot.slane %v955, %v959
        %v962 = vadd.f32 %v936, %v960
        %v963 = vmul.f32 %v947, %v962
        %v964 = vadd.f32 %v698, %v963
        %v965 = vtanh.pop %v964
        %v966 = vsub.f32 1.0, %v954
        %v967 = vmul.f32 %v966, %v965
        %v968 = vmul.f32 %v954, %v378
        %v969 = vadd.f32 %v967, %v968
        %970 = vst [vmem:[#allocation2] sm:$0xff] %v969
        %p971 = scmp.eq.s32.totalorder %s37, 7
        // Predicated region
        $region69: #{tpu_custom_call.1} parent=47 // pred_check
          %p972 = pneg %p971
        $region70: #{tpu_custom_call.1} parent=47 // pred_check_branch
          %974 = sbr.rel (%p972) target = $region72
        $region71: #{tpu_custom_call.1} parent=47 // pred_region
          %975 = vst [vmem:[#allocation14] sm:$0xff] %v969
        $region72: #{tpu_custom_call.1} parent=47 // pred_fallthru
          _
        %v976 = vpack.c.bf16 %v969, %v969
        %v977 = vld [vmem:[#allocation11] sm:$0xf]
        %v978 = vld [vmem:[#allocation11 + $0x4] sm:$0xf]
        %v979 = vld [vmem:[#allocation11 + $0x8] sm:$0xf]
        %v980 = vld [vmem:[#allocation11 + $0xc] sm:$0xf]
        %v981 = vld [vmem:[#allocation11 + $0x10] sm:$0xf]
        %v982 = vld [vmem:[#allocation11 + $0x14] sm:$0xf]
        %v983 = vld [vmem:[#allocation11 + $0x18] sm:$0xf]
        %v984 = vld [vmem:[#allocation11 + $0x1c] sm:$0xf]
        %v985 = vld [vmem:[#allocation11 + $0x20] sm:$0xf]
        %v986 = vld [vmem:[#allocation11 + $0x24] sm:$0xf]
        %v987 = vld [vmem:[#allocation11 + $0x28] sm:$0xf]
        %v988 = vld [vmem:[#allocation11 + $0x2c] sm:$0xf]
        %v989 = vld [vmem:[#allocation11 + $0x30] sm:$0xf]
        %v990 = vld [vmem:[#allocation11 + $0x34] sm:$0xf]
        %v991 = vld [vmem:[#allocation11 + $0x38] sm:$0xf]
        %v992 = vld [vmem:[#allocation11 + $0x3c] sm:$0xf]
        %v993 = vld [vmem:[%s7] sm:$0x1]
        %v995 = vlaneseq
        %v996 = vshrl.u32 %v995, 7
        %v997 = vsub.s32 0, %v996
        %v998 = vrot.slane %v993, %v997
        %v1016 = vunpack.c.l.b16 %v977
        %v1017 = vunpack.c.l.b16 %v978
        %v1018 = vunpack.c.l.b16 %v979
        %v1019 = vunpack.c.l.b16 %v980
        %v1020 = vunpack.c.l.b16 %v981
        %v1021 = vunpack.c.l.b16 %v982
        %v1022 = vunpack.c.l.b16 %v983
        %v1023 = vunpack.c.l.b16 %v984
        %v1024 = vunpack.c.l.b16 %v985
        %v1025 = vunpack.c.l.b16 %v986
        %v1026 = vunpack.c.l.b16 %v987
        %v1027 = vunpack.c.l.b16 %v988
        %v1028 = vunpack.c.l.b16 %v989
        %v1029 = vunpack.c.l.b16 %v990
        %v1030 = vunpack.c.l.b16 %v991
        %v1031 = vunpack.c.l.b16 %v992
        %v1032 = vpack.c.b16 %v1017, %v1016
        %v1033 = vpack.c.b16 %v1019, %v1018
        %v1034 = vpack.c.b16 %v1021, %v1020
        %v1035 = vpack.c.b16 %v1023, %v1022
        %v1036 = vpack.c.b16 %v1025, %v1024
        %v1037 = vpack.c.b16 %v1027, %v1026
        %v1038 = vpack.c.b16 %v1029, %v1028
        %v1039 = vpack.c.b16 %v1031, %v1030
        %1048 = vmatprep.subr.bf16.mxu0 0
        %1049 = vmatpush1.bf16.msra.mxu0 %v1032
        %1050 = vmatprep.subr.bf16.mxu0 0
        %1051 = vmatpush1.bf16.msra.mxu0 %v1033
        %1052 = vmatprep.subr.bf16.mxu0 0
        %1053 = vmatpush1.bf16.msra.mxu0 %v1034
        %1054 = vmatprep.subr.bf16.mxu0 0
        %1055 = vmatpush1.bf16.msra.mxu0 %v1035
        %1056 = vmatprep.subr.bf16.mxu0 0
        %1057 = vmatpush1.bf16.msra.mxu0 %v1036
        %1058 = vmatprep.subr.bf16.mxu0 0
        %1059 = vmatpush1.bf16.msra.mxu0 %v1037
        %1060 = vmatprep.subr.bf16.mxu0 0
        %1061 = vmatpush1.bf16.msra.mxu0 %v1038
        %1062 = vmatprep.subr.bf16.mxu0 0
        %1063 = vmatpush1.bf16.msra.mxu0 %v1039
        %1064 = vmatprep.subr.bf16.mxu0 0
        %1065 = vmatpush1.bf16.msra.mxu0 0
        %1066 = vmatprep.subr.bf16.mxu0 0
        %1067 = vmatpush1.bf16.msra.mxu0 0
        %1068 = vmatprep.subr.bf16.mxu0 0
        %1069 = vmatpush1.bf16.msra.mxu0 0
        %1070 = vmatprep.subr.bf16.mxu0 0
        %1071 = vmatpush1.bf16.msra.mxu0 0
        %1072 = vmatprep.subr.bf16.mxu0 0
        %1073 = vmatpush1.bf16.msra.mxu0 0
        %1074 = vmatprep.subr.bf16.mxu0 0
        %1075 = vmatpush1.bf16.msra.mxu0 0
        %1076 = vmatprep.subr.bf16.mxu0 0
        %1077 = vmatpush1.bf16.msra.mxu0 0
        %1078 = vmatprep.subr.bf16.mxu0 0
        %1079 = vmatpush1.bf16.msra.mxu0 0
        %1080 = vmatprep.mubr.bf16.mxu0 0
        %1081 = vmatmul.mubr.bf16.gmra.mrb[0].mxu0 %v976
        %v1082 = vpop.f32.mrb[0].mxu0
        %v1083 = vadd.f32 %v998, %v1082
        %v1084 = vpop.f32.mrb[0].mxu0
        %v1085 = vpop.f32.mrb[0].mxu0
        %v1086 = vpop.f32.mrb[0].mxu0
        %1087 = vdwg.mxu0
        %1088 = vmax.xlane.f32.xlu0 %v1083
        %v1089 = vpop.xlane.xlu0 %1088
        %v1090 = vsub.f32 %v1083, %v1089
        %v1091 = vmul.f32 %v1090, 1.442695
        %v1092 = vpow.pop %v1091
        %1093 = vadd.xlane.f32.xlu0 %v1092
        %v1094 = vpop.xlane.xlu0 %1093
        %v1095 = vlog2.pop %v1094
        %v1096 = vmul.f32 %v1095, 0.6931472
        %v1097 = vsub.f32 %v1090, %v1096
        %1098 = vst [vmem:[%s368] sm:$0xff] %v1097
        %s1099 = sand.u32 %s206, 1
        %s1100 = scalar_lea.sflag [#allocation7], %s1099
        %s1101 = sand.u32 %s206, 1
        %s1102 = smul.addr %s1101, 8
        %s1103 = scalar_lea.vmem [#allocation13], %s1102
        // Predicated region
        $region73: #{tpu_custom_call.1} parent=47 // pred_check
          %p1104 = pneg %p216
        $region74: #{tpu_custom_call.1} parent=47 // pred_check_branch
          %1106 = sbr.rel (%p1104) target = $region76
        $region75: #{tpu_custom_call.1} parent=47 // pred_region
          %s1108 = ssub.s32 128, 128
          %1109 = vsyncadd %s1100, %s1108
          %s1110 = sadd.s32 %s36, %s37
          %s1111 = smul.addr %s1110, 128
          %s1112 = scalar_lea.hbm %s8, %s1111
          %s1114 = sshll.u32 %s1103, 4
          %s1115 = int_to_ptr.vmem [resolvable:$true] %s1114
          %1117 = dma.vmem_to_hbm [thread:$0]  %s1115, 128, %s1112, %s1100
        $region76: #{tpu_custom_call.1} parent=47 // pred_fallthru
          _
        // Predicated region
        $region77: #{tpu_custom_call.1} parent=47 // pred_check
          %p1118 = pneg %p242
        $region78: #{tpu_custom_call.1} parent=47 // pred_check_branch
          %1120 = sbr.rel (%p1118) target = $region80
        $region79: #{tpu_custom_call.1} parent=47 // pred_region
          %s1122 = ssub.s32 128, 128
          %1123 = vsyncadd [#allocation15], %s1122
          %s1124 = smul.addr %s36, 128
          %s1125 = scalar_lea.hbm %s9, %s1124
          %s1127 = sshll.u32 [#allocation14], 4
          %s1128 = int_to_ptr.vmem [resolvable:$true] %s1127
          %1130 = dma.vmem_to_hbm [thread:$0]  %s1128, 128, %s1125, [#allocation15]
        $region80: #{tpu_custom_call.1} parent=47 // pred_fallthru
          _
        // Predicated region
        $region81: #{tpu_custom_call.1} parent=47 // pred_check
          %p1131 = pneg %p242
        $region82: #{tpu_custom_call.1} parent=47 // pred_check_branch
          %1133 = sbr.rel (%p1131) target = $region84
        $region83: #{tpu_custom_call.1} parent=47 // pred_region
          %1134 = dma.done [#allocation15], 128
        $region84: #{tpu_custom_call.1} parent=47 // pred_fallthru
          _
      $region48: #{tpu_custom_call.1} parent=5 // pred_fallthru
        _
      %p1135 = scmp.le.s32.totalorder 2, %s27
      // Predicated region
      $region85: #{tpu_custom_call.1} parent=5 // pred_check
        %p1136 = pneg %p1135
      $region86: #{tpu_custom_call.1} parent=5 // pred_check_branch
        %1138 = sbr.rel (%p1136) target = $region88
      $region87: #{tpu_custom_call.1} parent=5 // pred_region
        %s1139 = ssub.s32 %s27, 2
        // Predicated region
        $region89: #{tpu_custom_call.1} parent=87 // pred_check
          %p1140 = pneg %p222
        $region90: #{tpu_custom_call.1} parent=87 // pred_check_branch
          %1142 = sbr.rel (%p1140) target = $region92
        $region91: #{tpu_custom_call.1} parent=87 // pred_region
          %s1143 = sand.u32 %s207, 1
          %s1144 = scalar_lea.sflag [#allocation7], %s1143
          %s1145 = sand.u32 %s207, 1
          %s1146 = smul.addr %s1145, 8
          %s1147 = scalar_lea.vmem [#allocation13], %s1146
          %1148 = dma.done %s1144, 128
        $region92: #{tpu_custom_call.1} parent=87 // pred_fallthru
          _
      $region88: #{tpu_custom_call.1} parent=5 // pred_fallthru
        _
    $region6: #{tpu_custom_call.1} parent=1 // loop_footer
      %s31 = sadd.s32 1, %s27
    $region7: #{tpu_custom_call.1} parent=1 // loop_footer_branch
      %26 = sbr.rel target = $region3
    $region8: #{tpu_custom_call.1} parent=1 // loop_exit
      _
    %1149 = vsyncpa [#allocation6], 1
    %s1150 = scalar_lea.sflag [#allocation6], 1
    %1151 = vsyncpa %s1150, 1
    %1152 = vsyncpa [#allocation9], 1
    %1153 = vsyncpa [#allocation12], 1
    %1154 = vsyncpa [#allocation7], 1
    %s1155 = scalar_lea.sflag [#allocation7], 1
    %1156 = vsyncpa %s1155, 1
    %1157 = vsyncpa [#allocation15], 1

</llo_original>
